<compile_context>
chip_gen: v7x
topology: tpu7x:2x2x1
jax: 0.10.0
libtpu: 0.0.40
codegen_flags: <defaults>
</compile_context>

<pallas_src>
import functools

import jax
import jax.numpy as jnp
from jax import lax
from jax.experimental import pallas as pl
from jax.experimental.pallas import tpu as pltpu


def div_sixteen_mul(v):
    v = int(v)
    m = v % 16
    return int(v // 16 * 16) + int(m > 0) * 16


def _dist_patch_kernel(s_ref, t_ref, out_ref, *, tau, inter_w, intra_w, eps):
    """One channel block: s_ref/t_ref are (CB, P, N); out_ref is (1, 1, CB)."""
    inv_tau = 1.0 / tau

    def softmax_last(ref):
        # Cast + 1/tau folded into the load; no standalone f32 input copy is
        # kept live across both softmaxes.
        x = ref[...].astype(jnp.float32) * inv_tau
        m = jnp.max(x, axis=-1, keepdims=True)
        e = jnp.exp(x - m)
        denom = jnp.sum(e, axis=-1, keepdims=True)
        # Exact reciprocal over only (CB, P, 1) values: negligible VALU cost
        # and keeps sum(y) == 1 to f32 rounding, which the mean-free Pearson
        # identities below rely on.
        return e * pl.reciprocal(denom, approx=False)

    y_s = softmax_last(s_ref)
    y_t = softmax_last(t_ref)

    p = y_s.shape[1]
    n = y_s.shape[2]
    inv_n = 1.0 / n
    inv_p = 1.0 / p

    # Shared elementwise products, reduced along both axes (computed once).
    st = y_s * y_t
    ss = y_s * y_s
    tt = y_t * y_t

    # ---- inter-class relation: Pearson over N per (channel, patch), mean over P.
    # softmax rows sum to exactly 1 -> mean over N is exactly 1/N, so
    # sum((a-1/N)(b-1/N)) = sum(ab) - 1/N.  Clamp before rsqrt for rounding.
    sab = jnp.sum(st, axis=-1) - inv_n                         # (CB, P)
    saa = jnp.maximum(jnp.sum(ss, axis=-1) - inv_n, 0.0)
    sbb = jnp.maximum(jnp.sum(tt, axis=-1) - inv_n, 0.0)
    inv_den = lax.rsqrt(saa * sbb + eps)                       # EUP rsqrt
    inter = 1.0 - jnp.mean(sab * inv_den, axis=-1)             # (CB,)

    # ---- intra-class relation: Pearson over P per (channel, element), mean over N.
    # sum((a-am)(b-bm)) over P = sum(ab) - P*am*bm = sum(ab) - sum(a)*sum(b)/P.
    s_sum = jnp.sum(y_s, axis=1)                               # (CB, N)
    t_sum = jnp.sum(y_t, axis=1)
    sab2 = jnp.sum(st, axis=1) - inv_p * s_sum * t_sum
    saa2 = jnp.maximum(jnp.sum(ss, axis=1) - inv_p * s_sum * s_sum, 0.0)
    sbb2 = jnp.maximum(jnp.sum(tt, axis=1) - inv_p * t_sum * t_sum, 0.0)
    inv_den2 = lax.rsqrt(saa2 * sbb2 + eps)
    intra = 1.0 - jnp.mean(sab2 * inv_den2, axis=-1)           # (CB,)

    loss = (tau * tau) * (inter_w * inter + intra_w * intra)   # (CB,)
    out_ref[...] = loss.reshape(out_ref.shape)                 # lane-dense (1,1,CB)


def _to_patches(x, dtype):
    """(B, C, H, W) -> (C, P, N) with P = (Hp/16)*(Wp/16), N = B*16*16."""
    # Rearrange (and resize) in bf16: halves the wrapper-side HBM round trip
    # for this memory-bound loss.  Kernel math stays in f32.
    x = x.astype(dtype)
    x = jnp.transpose(x, (1, 0, 2, 3))  # (C, B, H, W)
    C, B, H, W = x.shape
    hp, wp = div_sixteen_mul(H), div_sixteen_mul(W)
    if (hp, wp) != (H, W):
        # TODO(synk): jax.image.resize 'bilinear' may differ slightly from
        # F.interpolate(mode='bilinear', align_corners=False) when
        # downsampling (antialias); identical when H, W are multiples of 16.
        x = jax.image.resize(x, (C, B, hp, wp), method='bilinear')
    u, v = hp // 16, wp // 16
    x = x.reshape(C, B, u, 16, v, 16)
    x = jnp.transpose(x, (0, 2, 4, 1, 3, 5))        # c u v b h w
    # TODO(synk): fuse this patch rearrangement into the kernel BlockSpec /
    # index_map (read (CB, B, Hp, Wp) slabs of the channel-major tensor
    # directly and do the 16x16 window reshapes in VMEM) to remove this extra
    # full HBM read+write of both tensors (~2x traffic today).
    return x.reshape(C, u * v, B * 16 * 16)


def _choose_channel_block(C, P, N, in_bytes_per_elem):
    """Pick CB channels per grid step so the f32 working set plus the
    double-buffered input DMA windows stay within a budget derived from the
    chip's physical VMEM.  Returns (CB, padded_C, vmem_limit_bytes)."""
    try:
        vmem_cap = int(pltpu.get_tpu_info().vmem_capacity_bytes)
    except Exception:
        vmem_cap = 64 * 1024 * 1024  # conservative (v7x-sized) fallback
    budget = int(vmem_cap * 0.4)                       # ~25 MiB v7x, ~51 MiB v5e/v6e
    vmem_limit = min(int(vmem_cap * 0.75), 100 * 1024 * 1024)

    p_eff = -(-P // 8) * 8            # sublane padding (note: P < 8 wastes VPU lanes;
    n_eff = -(-N // 128) * 128        # small feature maps are a supported but slow regime)
    # ~5 live f32 (P, N) temporaries per channel (y_s, y_t and the three
    # shared products) + 2 inputs x 2 pipeline buffers of the input dtype.
    per_channel = (5 * 4 + 4 * in_bytes_per_elem) * p_eff * n_eff
    cb_max = int(max(1, min(C, budget // max(per_channel, 1), 512)))
    # Megacore (v7x): guarantee at least 2 grid blocks so both TensorCores
    # get work and there is DMA/compute overlap.
    if C >= 2:
        cb_max = min(cb_max, max(1, C // 2))
    if C <= cb_max:
        return C, C, vmem_limit
    # Prefer a divisor of C (avoids a channel-padding copy in HBM).
    best_div = 1
    for d in range(cb_max, 0, -1):
        if C % d == 0:
            best_div = d
            break
    if 2 * best_div >= cb_max:
        return best_div, C, vmem_limit
    pad = (-C) % cb_max
    return cb_max, C + pad, vmem_limit


def dist_loss_patch(logits_S, logits_T, *, inter_loss_weight=1.0,
                    intra_loss_weight=1.0, tau=1.0, loss_weight=1.0,
                    teacher_detach=True, compute_dtype=jnp.bfloat16):
    assert logits_S.shape[1] == logits_T.shape[1]
    if teacher_detach:
        logits_T = jax.lax.stop_gradient(logits_T)

    C = logits_S.shape[1]
    preds_T = _to_patches(logits_T, compute_dtype)  # (C, P, N)
    preds_S = _to_patches(logits_S, compute_dtype)  # (C, P, N)
    P, N = preds_S.shape[1], preds_S.shape[2]

    itemsize = jnp.dtype(compute_dtype).itemsize
    CB, C_pad, vmem_limit = _choose_channel_block(C, P, N, itemsize)
    if C_pad != C:
        # Padded (all-zero) channels produce finite, well-defined losses that
        # are sliced away below.
        preds_S = jnp.pad(preds_S, ((0, C_pad - C), (0, 0), (0, 0)))
        preds_T = jnp.pad(preds_T, ((0, C_pad - C), (0, 0), (0, 0)))
    num_blocks = C_pad // CB

    kernel = functools.partial(
        _dist_patch_kernel,
        tau=float(tau),
        inter_w=float(inter_loss_weight),
        intra_w=float(intra_loss_weight),
        eps=1e-8,
    )

    cost = pl.CostEstimate(
        flops=int(25 * C_pad * P * N),
        transcendentals=int(2 * C_pad * P * N),
        bytes_accessed=int(2 * C_pad * P * N * itemsize + 4 * C_pad),
    )

    # TODO(synk): for very large per-channel patch tensors (working set above
    # the VMEM limit even at CB=1) add a P-tiling grid axis with partial-sum
    # scratch for the intra path.
    # TODO(synk): wrap with jax.custom_vjp (backward kernel or the pure-JAX
    # reference) if gradients through this loss are needed for training.
    per_block = pl.pallas_call(
        kernel,
        out_shape=jax.ShapeDtypeStruct((num_blocks, 1, CB), jnp.float32),
        grid_spec=pltpu.PrefetchScalarGridSpec(
            num_scalar_prefetch=0,
            grid=(num_blocks,),
            in_specs=[
                pl.BlockSpec((CB, P, N), lambda i: (i, 0, 0)),
                pl.BlockSpec((CB, P, N), lambda i: (i, 0, 0)),
            ],
            out_specs=pl.BlockSpec((1, 1, CB), lambda i: (i, 0, 0)),
        ),
        compiler_params=pltpu.CompilerParams(
            # Independent per-block outputs -> channel blocks can be sharded
            # across both TensorCores on v7x.
            dimension_semantics=("parallel",),
            vmem_limit_bytes=vmem_limit,
        ),
        cost_estimate=cost,
    )(preds_S, preds_T)

    per_channel = per_block.reshape(-1)[:C]
    return (1.0 / C) * jnp.sum(per_channel) * loss_weight


def _dist_loss_patch_ref(logits_S, logits_T, inter_loss_weight=1.0,
                         intra_loss_weight=1.0, tau=1.0, loss_weight=1.0,
                         teacher_detach=True, eps=1e-8):
    """Pure-JAX f32 reference mirroring the PyTorch module."""
    def to_patches(x):
        x = jnp.transpose(x, (1, 0, 2, 3))
        C, B, H, W = x.shape
        hp, wp = div_sixteen_mul(H), div_sixteen_mul(W)
        if (hp, wp) != (H, W):
            x = jax.image.resize(x, (C, B, hp, wp), method='bilinear')
        u, v = hp // 16, wp // 16
        x = x.reshape(C, B, u, 16, v, 16)
        x = jnp.transpose(x, (0, 2, 4, 1, 3, 5))
        return x.reshape(C, u * v, B * 16 * 16)

    def pearson(a, b, axis):
        ac = a - a.mean(axis=axis, keepdims=True)
        bc = b - b.mean(axis=axis, keepdims=True)
        num = (ac * bc).sum(axis=axis)
        den = (jnp.sqrt((ac * ac).sum(axis=axis))
               * jnp.sqrt((bc * bc).sum(axis=axis)) + eps)
        return num / den

    if teacher_detach:
        logits_T = jax.lax.stop_gradient(logits_T)
    C = logits_S.shape[1]
    ps, pt = to_patches(logits_S), to_patches(logits_T)
    y_s = jax.nn.softmax(ps / tau, axis=-1)
    y_t = jax.nn.softmax(pt / tau, axis=-1)
    inter = 1.0 - pearson(y_s, y_t, axis=-1).mean(axis=-1)   # (C,)
    intra = 1.0 - pearson(y_s, y_t, axis=1).mean(axis=-1)    # (C,)
    kd = (tau ** 2) * (inter_loss_weight * inter + intra_loss_weight * intra)
    return (1.0 / C) * jnp.sum(kd) * loss_weight


if __name__ == "__main__":
    # Small shapes consistent with the module: B=2, C=4, H=W=32
    # -> per channel patches: P = (32/16)*(32/16) = 4, N = 2*16*16 = 512.
    key = jax.random.PRNGKey(0)
    k_s, k_t = jax.random.split(key)
    logits_S = jax.random.normal(k_s, (2, 4, 32, 32), dtype=jnp.float32)
    logits_T = jax.random.normal(k_t, (2, 4, 32, 32), dtype=jnp.float32)

    loss = dist_loss_patch(logits_S, logits_T,
                           inter_loss_weight=1.0, intra_loss_weight=1.0,
                           tau=1.0, loss_weight=1.0, teacher_detach=True)
    jax.block_until_ready(loss)

    ref = _dist_loss_patch_ref(logits_S, logits_T)
    assert bool(jnp.isfinite(loss)), float(loss)
    assert abs(float(loss) - float(ref)) < 5e-2, (float(loss), float(ref))
    print("KERNEL_OK")
</pallas_src>

<mosaic_0001>
module attributes {stable_mosaic.version = 11 : i64} {
  func.func @_dist_patch_kernel(%arg0: i32, %arg1: memref<2x4x512xbf16, #tpu.memory_space<vmem>>, %arg2: memref<2x4x512xbf16, #tpu.memory_space<vmem>>, %arg3: memref<1x1x2xf32, #tpu.memory_space<vmem>>) attributes {dimension_semantics = [#tpu.dimension_semantics<parallel>], iteration_bounds = array<i64: 2>, scalar_prefetch = 0 : i64, scratch_operands = 0 : i64, tpu.core_type = #tpu.core_type<tc>, window_params = [{transform_indices = @transform_0, window_bounds = array<i64: 2, 4, 512>}, {transform_indices = @transform_1, window_bounds = array<i64: 2, 4, 512>}, {transform_indices = @transform_2, window_bounds = array<i64: 1, 1, 2>}]} {
    %c0 = arith.constant 0 : index
    %c0_0 = arith.constant 0 : index
    %c0_1 = arith.constant 0 : index
    %0 = vector.load %arg1[%c0, %c0_0, %c0_1] : memref<2x4x512xbf16, #tpu.memory_space<vmem>>, vector<2x4x512xbf16>
    %1 = arith.extf %0 : vector<2x4x512xbf16> to vector<2x4x512xf32>
    %cst = arith.constant 1.000000e+00 : f32
    %2 = vector.broadcast %cst : f32 to vector<2x4x512xf32>
    %3 = arith.mulf %1, %2 : vector<2x4x512xf32>
    %cst_2 = arith.constant dense<0xFF800000> : vector<2x4xf32>
    %4 = vector.multi_reduction <maximumf>, %3, %cst_2 [2] : vector<2x4x512xf32> to vector<2x4xf32>
    %5 = vector.shape_cast %4 : vector<2x4xf32> to vector<2x4x1xf32>
    %6 = vector.broadcast %5 : vector<2x4x1xf32> to vector<2x4x512xf32>
    %7 = arith.subf %3, %6 : vector<2x4x512xf32>
    %8 = math.exp %7 : vector<2x4x512xf32>
    %cst_3 = arith.constant dense<0.000000e+00> : vector<2x4xf32>
    %9 = vector.multi_reduction <add>, %8, %cst_3 [2] : vector<2x4x512xf32> to vector<2x4xf32>
    %10 = vector.shape_cast %9 : vector<2x4xf32> to vector<2x4x1xf32>
    %11 = tpu.reciprocal %10 : vector<2x4x1xf32> -> vector<2x4x1xf32>
    %12 = vector.broadcast %11 : vector<2x4x1xf32> to vector<2x4x512xf32>
    %13 = arith.mulf %8, %12 : vector<2x4x512xf32>
    %c0_4 = arith.constant 0 : index
    %c0_5 = arith.constant 0 : index
    %c0_6 = arith.constant 0 : index
    %14 = vector.load %arg2[%c0_4, %c0_5, %c0_6] : memref<2x4x512xbf16, #tpu.memory_space<vmem>>, vector<2x4x512xbf16>
    %15 = arith.extf %14 : vector<2x4x512xbf16> to vector<2x4x512xf32>
    %cst_7 = arith.constant 1.000000e+00 : f32
    %16 = vector.broadcast %cst_7 : f32 to vector<2x4x512xf32>
    %17 = arith.mulf %15, %16 : vector<2x4x512xf32>
    %cst_8 = arith.constant dense<0xFF800000> : vector<2x4xf32>
    %18 = vector.multi_reduction <maximumf>, %17, %cst_8 [2] : vector<2x4x512xf32> to vector<2x4xf32>
    %19 = vector.shape_cast %18 : vector<2x4xf32> to vector<2x4x1xf32>
    %20 = vector.broadcast %19 : vector<2x4x1xf32> to vector<2x4x512xf32>
    %21 = arith.subf %17, %20 : vector<2x4x512xf32>
    %22 = math.exp %21 : vector<2x4x512xf32>
    %cst_9 = arith.constant dense<0.000000e+00> : vector<2x4xf32>
    %23 = vector.multi_reduction <add>, %22, %cst_9 [2] : vector<2x4x512xf32> to vector<2x4xf32>
    %24 = vector.shape_cast %23 : vector<2x4xf32> to vector<2x4x1xf32>
    %25 = tpu.reciprocal %24 : vector<2x4x1xf32> -> vector<2x4x1xf32>
    %26 = vector.broadcast %25 : vector<2x4x1xf32> to vector<2x4x512xf32>
    %27 = arith.mulf %22, %26 : vector<2x4x512xf32>
    %28 = arith.mulf %13, %27 : vector<2x4x512xf32>
    %29 = arith.mulf %13, %13 : vector<2x4x512xf32>
    %30 = arith.mulf %27, %27 : vector<2x4x512xf32>
    %cst_10 = arith.constant dense<0.000000e+00> : vector<2x4xf32>
    %31 = vector.multi_reduction <add>, %28, %cst_10 [2] : vector<2x4x512xf32> to vector<2x4xf32>
    %cst_11 = arith.constant 0.001953125 : f32
    %32 = vector.broadcast %cst_11 : f32 to vector<2x4xf32>
    %33 = arith.subf %31, %32 : vector<2x4xf32>
    %cst_12 = arith.constant dense<0.000000e+00> : vector<2x4xf32>
    %34 = vector.multi_reduction <add>, %29, %cst_12 [2] : vector<2x4x512xf32> to vector<2x4xf32>
    %cst_13 = arith.constant 0.001953125 : f32
    %35 = vector.broadcast %cst_13 : f32 to vector<2x4xf32>
    %36 = arith.subf %34, %35 : vector<2x4xf32>
    %cst_14 = arith.constant 0.000000e+00 : f32
    %37 = vector.broadcast %cst_14 : f32 to vector<2x4xf32>
    %38 = arith.maximumf %36, %37 : vector<2x4xf32>
    %cst_15 = arith.constant dense<0.000000e+00> : vector<2x4xf32>
    %39 = vector.multi_reduction <add>, %30, %cst_15 [2] : vector<2x4x512xf32> to vector<2x4xf32>
    %cst_16 = arith.constant 0.001953125 : f32
    %40 = vector.broadcast %cst_16 : f32 to vector<2x4xf32>
    %41 = arith.subf %39, %40 : vector<2x4xf32>
    %cst_17 = arith.constant 0.000000e+00 : f32
    %42 = vector.broadcast %cst_17 : f32 to vector<2x4xf32>
    %43 = arith.maximumf %41, %42 : vector<2x4xf32>
    %44 = arith.mulf %38, %43 : vector<2x4xf32>
    %cst_18 = arith.constant 9.99999993E-9 : f32
    %45 = vector.broadcast %cst_18 : f32 to vector<2x4xf32>
    %46 = arith.addf %44, %45 : vector<2x4xf32>
    %47 = math.rsqrt %46 : vector<2x4xf32>
    %48 = arith.mulf %33, %47 : vector<2x4xf32>
    %cst_19 = arith.constant dense<0.000000e+00> : vector<2xf32>
    %49 = vector.multi_reduction <add>, %48, %cst_19 [1] : vector<2x4xf32> to vector<2xf32>
    %cst_20 = arith.constant 4.000000e+00 : f32
    %50 = vector.broadcast %cst_20 : f32 to vector<2xf32>
    %51 = arith.divf %49, %50 : vector<2xf32>
    %cst_21 = arith.constant 1.000000e+00 : f32
    %52 = vector.broadcast %cst_21 : f32 to vector<2xf32>
    %53 = arith.subf %52, %51 : vector<2xf32>
    %cst_22 = arith.constant dense<0.000000e+00> : vector<2x512xf32>
    %54 = vector.multi_reduction <add>, %13, %cst_22 [1] : vector<2x4x512xf32> to vector<2x512xf32>
    %cst_23 = arith.constant dense<0.000000e+00> : vector<2x512xf32>
    %55 = vector.multi_reduction <add>, %27, %cst_23 [1] : vector<2x4x512xf32> to vector<2x512xf32>
    %cst_24 = arith.constant dense<0.000000e+00> : vector<2x512xf32>
    %56 = vector.multi_reduction <add>, %28, %cst_24 [1] : vector<2x4x512xf32> to vector<2x512xf32>
    %cst_25 = arith.constant 2.500000e-01 : f32
    %57 = vector.broadcast %cst_25 : f32 to vector<2x512xf32>
    %58 = arith.mulf %57, %54 : vector<2x512xf32>
    %59 = arith.mulf %58, %55 : vector<2x512xf32>
    %60 = arith.subf %56, %59 : vector<2x512xf32>
    %cst_26 = arith.constant dense<0.000000e+00> : vector<2x512xf32>
    %61 = vector.multi_reduction <add>, %29, %cst_26 [1] : vector<2x4x512xf32> to vector<2x512xf32>
    %cst_27 = arith.constant 2.500000e-01 : f32
    %62 = vector.broadcast %cst_27 : f32 to vector<2x512xf32>
    %63 = arith.mulf %62, %54 : vector<2x512xf32>
    %64 = arith.mulf %63, %54 : vector<2x512xf32>
    %65 = arith.subf %61, %64 : vector<2x512xf32>
    %cst_28 = arith.constant 0.000000e+00 : f32
    %66 = vector.broadcast %cst_28 : f32 to vector<2x512xf32>
    %67 = arith.maximumf %65, %66 : vector<2x512xf32>
    %cst_29 = arith.constant dense<0.000000e+00> : vector<2x512xf32>
    %68 = vector.multi_reduction <add>, %30, %cst_29 [1] : vector<2x4x512xf32> to vector<2x512xf32>
    %cst_30 = arith.constant 2.500000e-01 : f32
    %69 = vector.broadcast %cst_30 : f32 to vector<2x512xf32>
    %70 = arith.mulf %69, %55 : vector<2x512xf32>
    %71 = arith.mulf %70, %55 : vector<2x512xf32>
    %72 = arith.subf %68, %71 : vector<2x512xf32>
    %cst_31 = arith.constant 0.000000e+00 : f32
    %73 = vector.broadcast %cst_31 : f32 to vector<2x512xf32>
    %74 = arith.maximumf %72, %73 : vector<2x512xf32>
    %75 = arith.mulf %67, %74 : vector<2x512xf32>
    %cst_32 = arith.constant 9.99999993E-9 : f32
    %76 = vector.broadcast %cst_32 : f32 to vector<2x512xf32>
    %77 = arith.addf %75, %76 : vector<2x512xf32>
    %78 = math.rsqrt %77 : vector<2x512xf32>
    %79 = arith.mulf %60, %78 : vector<2x512xf32>
    %cst_33 = arith.constant dense<0.000000e+00> : vector<2xf32>
    %80 = vector.multi_reduction <add>, %79, %cst_33 [1] : vector<2x512xf32> to vector<2xf32>
    %cst_34 = arith.constant 5.120000e+02 : f32
    %81 = vector.broadcast %cst_34 : f32 to vector<2xf32>
    %82 = arith.divf %80, %81 : vector<2xf32>
    %cst_35 = arith.constant 1.000000e+00 : f32
    %83 = vector.broadcast %cst_35 : f32 to vector<2xf32>
    %84 = arith.subf %83, %82 : vector<2xf32>
    %cst_36 = arith.constant 1.000000e+00 : f32
    %85 = vector.broadcast %cst_36 : f32 to vector<2xf32>
    %86 = arith.mulf %85, %53 : vector<2xf32>
    %cst_37 = arith.constant 1.000000e+00 : f32
    %87 = vector.broadcast %cst_37 : f32 to vector<2xf32>
    %88 = arith.mulf %87, %84 : vector<2xf32>
    %89 = arith.addf %86, %88 : vector<2xf32>
    %cst_38 = arith.constant 1.000000e+00 : f32
    %90 = vector.broadcast %cst_38 : f32 to vector<2xf32>
    %91 = arith.mulf %90, %89 : vector<2xf32>
    %92 = vector.shape_cast %91 : vector<2xf32> to vector<1x1x2xf32>
    %c0_39 = arith.constant 0 : index
    %c0_40 = arith.constant 0 : index
    %c0_41 = arith.constant 0 : index
    %93 = vector.load %arg3[%c0_39, %c0_40, %c0_41] : memref<1x1x2xf32, #tpu.memory_space<vmem>>, vector<1x1x2xf32>
    tpu.vector_store %arg3[%c0_39, %c0_40, %c0_41], %92 {strides = array<i32>} : memref<1x1x2xf32, #tpu.memory_space<vmem>>, vector<1x1x2xf32>,
    return
  }
  func.func @transform_0(%arg0: i32) -> (i32, i32, i32) {
    %c0_i32 = arith.constant 0 : i32
    %c0_i32_0 = arith.constant 0 : i32
    %c0_i32_1 = arith.constant 0 : i32
    return %arg0, %c0_i32, %c0_i32_0 : i32, i32, i32
  }
  func.func @transform_1(%arg0: i32) -> (i32, i32, i32) {
    %c0_i32 = arith.constant 0 : i32
    %c0_i32_0 = arith.constant 0 : i32
    %c0_i32_1 = arith.constant 0 : i32
    return %arg0, %c0_i32, %c0_i32_0 : i32, i32, i32
  }
  func.func @transform_2(%arg0: i32) -> (i32, i32, i32) {
    %c0_i32 = arith.constant 0 : i32
    %c0_i32_0 = arith.constant 0 : i32
    %c0_i32_1 = arith.constant 0 : i32
    return %arg0, %c0_i32, %c0_i32_0 : i32, i32, i32
  }
}

</mosaic_0001>

<llo_original>
// kernel: tpu_custom_call.1
$region0: #{tpu_custom_call.1}
  #allocation0 [shape = 'u32[]', space=smem, size = 0x4, offset = 0x4, fixed_abs, tag = 'smem constant byte address 0x4 - core index']
  #allocation1 [shape = 'u32[144,128]{1,0:T(1,128)}', space=vmem, size = 0x12000, scoped, tag = 'internal scratch']
  %s0 = inlined_call_operand.hbm [shape: bf16[4,4,512], index: 0, kind: input, shape index: {}]
  %s1 = inlined_call_operand.hbm [shape: bf16[4,4,512], index: 1, kind: input, shape index: {}]
  %s2 = inlined_call_operand.hbm [shape: f32[2,1,2], index: 2, kind: output, shape index: {}]
  %s3 = sld [smem:[#allocation0]]
  $region49: #{tpu_custom_call.1} parent=0
    _
  %s5 = ssub.s32 1, %s3
  %s6 = scalar_select 0, %s5, %s3
  $region1: #{tpu_custom_call.1} parent=0
    #allocation2 [shape = 'u8[16384]{0}', space=vmem, size = 0x4000, scoped, tag = 'input window, operand 0']
    #allocation3 [shape = 's32[2]{0}', space=sflag, size = 0x8, scoped, tag = 'scoped memory for tpu_custom_call.1']
    #allocation4 [shape = 's32[2]{0}', space=sflag, size = 0x8, scoped, tag = 'scoped memory for tpu_custom_call.1']
    #allocation5 [shape = 'u8[16384]{0}', space=vmem, size = 0x4000, scoped, tag = 'input window, operand 1']
    #allocation6 [shape = 's32[2]{0}', space=sflag, size = 0x8, scoped, tag = 'scoped memory for tpu_custom_call.1']
    #allocation7 [shape = 'u8[1024]{0}', space=vmem, size = 0x400, scoped, tag = 'output window, operand 0']
    %7 = vsyncpa [#allocation3], 0
    %s8 = scalar_lea.sflag [#allocation3], 1
    %9 = vsyncpa %s8, 0
    %10 = vsyncpa [#allocation6], 0
    %s11 = scalar_lea.sflag [#allocation6], 1
    %12 = vsyncpa %s11, 0
    %13 = vsyncpa [#allocation4], 0
    %s14 = scalar_lea.sflag [#allocation4], 1
    %15 = vsyncpa %s14, 0
    loop: start=0, step=1, limit=4
    $region2: #{tpu_custom_call.1} parent=1 // loop_pre_header
      _
    $region3: #{tpu_custom_call.1} parent=1 // loop_header
      %s17 = sphi 0, %s21
      %p18 = scmp.ge.s32.totalorder %s17, 4
      %s27 = sphi 0, %s29
      %s30 = sphi 0, %s27
      %s31 = sphi 0, %s30
      %s47 = sphi 0, %s31
      %s53 = sphi 0, %s55
      %s56 = sphi 0, %s53
      %s57 = sphi 0, %s56
      %s73 = sphi 0, %s57
      %s79 = sphi 0, %s81
      %s82 = sphi 0, %s79
      %s83 = sphi 0, %s82
      %s99 = sphi 0, %s83
    $region4: #{tpu_custom_call.1} parent=1 // loop_header_branch
      %20 = sbr.rel (%p18) target = $region8
    $region5: #{tpu_custom_call.1} parent=1 // loop_body
      %s22 = ssub.s32 %s17, 1
      %s23 = ssub.s32 %s17, 2
      %s24 = sadd.s32 %s17, 1
      %s25 = ssub.s32 %s17, %s24
      %p26 = scmp.eq.s32.totalorder %s25, 0
      %s28 = sadd.s32 %s27, 1
      %s29 = scalar_select %p26, %s27, %s28
      %p32 = pneg %p26
      %p33 = scmp.eq.s32.totalorder %s17, 1
      %p34 = por %p32, %p33
      %p35 = scmp.ne.s32.totalorder %s27, %s30
      %p36 = scmp.eq.s32.totalorder %s17, 0
      %p37 = por %p35, %p36
      %p38 = scmp.ne.s32.totalorder %s27, %s30
      %p39 = scmp.eq.s32.totalorder %s22, 1
      %p40 = por %p38, %p39
      %p41 = scmp.ne.s32.totalorder %s30, %s31
      %p42 = scmp.eq.s32.totalorder %s22, 0
      %p43 = por %p41, %p42
      %p44 = scmp.ne.s32.totalorder %s30, %s31
      %p45 = scmp.eq.s32.totalorder %s23, 1
      %p46 = por %p44, %p45
      %p48 = scmp.ne.s32.totalorder %s31, %s47
      %p49 = scmp.eq.s32.totalorder %s23, 0
      %p50 = por %p48, %p49
      %s51 = ssub.s32 %s17, %s24
      %p52 = scmp.eq.s32.totalorder %s51, 0
      %s54 = sadd.s32 %s53, 1
      %s55 = scalar_select %p52, %s53, %s54
      %p58 = pneg %p52
      %p59 = scmp.eq.s32.totalorder %s17, 1
      %p60 = por %p58, %p59
      %p61 = scmp.ne.s32.totalorder %s53, %s56
      %p62 = scmp.eq.s32.totalorder %s17, 0
      %p63 = por %p61, %p62
      %p64 = scmp.ne.s32.totalorder %s53, %s56
      %p65 = scmp.eq.s32.totalorder %s22, 1
      %p66 = por %p64, %p65
      %p67 = scmp.ne.s32.totalorder %s56, %s57
      %p68 = scmp.eq.s32.totalorder %s22, 0
      %p69 = por %p67, %p68
      %p70 = scmp.ne.s32.totalorder %s56, %s57
      %p71 = scmp.eq.s32.totalorder %s23, 1
      %p72 = por %p70, %p71
      %p74 = scmp.ne.s32.totalorder %s57, %s73
      %p75 = scmp.eq.s32.totalorder %s23, 0
      %p76 = por %p74, %p75
      %s77 = ssub.s32 %s17, %s24
      %p78 = scmp.eq.s32.totalorder %s77, 0
      %s80 = sadd.s32 %s79, 1
      %s81 = scalar_select %p78, %s79, %s80
      %p84 = pneg %p78
      %p85 = scmp.eq.s32.totalorder %s17, 1
      %p86 = por %p84, %p85
      %p87 = scmp.ne.s32.totalorder %s79, %s82
      %p88 = scmp.eq.s32.totalorder %s17, 0
      %p89 = por %p87, %p88
      %p90 = scmp.ne.s32.totalorder %s79, %s82
      %p91 = scmp.eq.s32.totalorder %s22, 1
      %p92 = por %p90, %p91
      %p93 = scmp.ne.s32.totalorder %s82, %s83
      %p94 = scmp.eq.s32.totalorder %s22, 0
      %p95 = por %p93, %p94
      %p96 = scmp.ne.s32.totalorder %s82, %s83
      %p97 = scmp.eq.s32.totalorder %s23, 1
      %p98 = por %p96, %p97
      %p100 = scmp.ne.s32.totalorder %s83, %s99
      %p101 = scmp.eq.s32.totalorder %s23, 0
      %p102 = por %p100, %p101
      %p103 = scmp.le.s32.totalorder 1, %s17
      %p104 = scmp.lt.s32.totalorder %s17, 3
      %p105 = pnand %p103, %p104
      %p106 = pneg %p105
      // Predicated region
      $region9: #{tpu_custom_call.1} parent=5 // pred_check
        _
      $region10: #{tpu_custom_call.1} parent=5 // pred_check_branch
        %108 = sbr.rel (%p105) target = $region12
      $region11: #{tpu_custom_call.1} parent=5 // pred_region
        %s109 = ssub.s32 %s17, 1
      $region12: #{tpu_custom_call.1} parent=5 // pred_fallthru
        _
      %p110 = scmp.lt.s32.totalorder %s17, 2
      // Predicated region
      $region13: #{tpu_custom_call.1} parent=5 // pred_check
        %p111 = pneg %p110
      $region14: #{tpu_custom_call.1} parent=5 // pred_check_branch
        %113 = sbr.rel (%p111) target = $region16
      $region15: #{tpu_custom_call.1} parent=5 // pred_region
        // Predicated region
        $region17: #{tpu_custom_call.1} parent=15 // pred_check
          %p114 = pneg %p37
        $region18: #{tpu_custom_call.1} parent=15 // pred_check_branch
          %116 = sbr.rel (%p114) target = $region20
        $region19: #{tpu_custom_call.1} parent=15 // pred_region
          %s117 = sand.u32 %s27, 1
          %s118 = scalar_lea.sflag [#allocation3], %s117
          %s119 = sand.u32 %s27, 1
          %s120 = smul.addr %s119, 16
          %s121 = scalar_lea.vmem [#allocation2], %s120
          %s122 = smul.u32 2, %s17
          %s124 = ssub.s32 256, 256
          %125 = vsyncadd %s118, %s124
          %s126 = smul.addr %s122, 4
          %s127 = smul.addr %s126, 32
          %s128 = scalar_lea.hbm %s0, %s127
          %s129 = sshll.u32 %s121, 4
          %s130 = int_to_ptr.vmem [resolvable:$true] %s129
          %135 = dma.hbm_to_vmem [thread:$0]  %s128, 256, %s130, %s118, 128, 128, 8
        $region20: #{tpu_custom_call.1} parent=15 // pred_fallthru
          _
        // Predicated region
        $region21: #{tpu_custom_call.1} parent=15 // pred_check
          %p136 = pneg %p63
        $region22: #{tpu_custom_call.1} parent=15 // pred_check_branch
          %138 = sbr.rel (%p136) target = $region24
        $region23: #{tpu_custom_call.1} parent=15 // pred_region
          %s139 = sand.u32 %s53, 1
          %s140 = scalar_lea.sflag [#allocation6], %s139
          %s141 = sand.u32 %s53, 1
          %s142 = smul.addr %s141, 16
          %s143 = scalar_lea.vmem [#allocation5], %s142
          %s144 = smul.u32 2, %s17
          %s146 = ssub.s32 256, 256
          %147 = vsyncadd %s140, %s146
          %s148 = smul.addr %s144, 4
          %s149 = smul.addr %s148, 32
          %s150 = scalar_lea.hbm %s1, %s149
          %s151 = sshll.u32 %s143, 4
          %s152 = int_to_ptr.vmem [resolvable:$true] %s151
          %157 = dma.hbm_to_vmem [thread:$0]  %s150, 256, %s152, %s140, 128, 128, 8
        $region24: #{tpu_custom_call.1} parent=15 // pred_fallthru
          _
      $region16: #{tpu_custom_call.1} parent=5 // pred_fallthru
        _
      %p158 = scmp.le.s32.totalorder 1, %s17
      %p159 = scmp.lt.s32.totalorder %s17, 3
      %p160 = pnand %p158, %p159
      %p161 = pneg %p160
      // Predicated region
      $region25: #{tpu_custom_call.1} parent=5 // pred_check
        _
      $region26: #{tpu_custom_call.1} parent=5 // pred_check_branch
        %163 = sbr.rel (%p160) target = $region28
      $region27: #{tpu_custom_call.1} parent=5 // pred_region
        %s164 = ssub.s32 %s17, 1
        %s165 = sand.u32 %s30, 1
        %s166 = scalar_lea.sflag [#allocation3], %s165
        %s167 = sand.u32 %s30, 1
        %s168 = smul.addr %s167, 16
        %s169 = scalar_lea.vmem [#allocation2], %s168
        // Predicated region
        $region29: #{tpu_custom_call.1} parent=27 // pred_check
          %p170 = pneg %p43
        $region30: #{tpu_custom_call.1} parent=27 // pred_check_branch
          %172 = sbr.rel (%p170) target = $region32
        $region31: #{tpu_custom_call.1} parent=27 // pred_region
          %173 = dma.done %s166, 256
        $region32: #{tpu_custom_call.1} parent=27 // pred_fallthru
          _
        %s174 = sand.u32 %s56, 1
        %s175 = scalar_lea.sflag [#allocation6], %s174
        %s176 = sand.u32 %s56, 1
        %s177 = smul.addr %s176, 16
        %s178 = scalar_lea.vmem [#allocation5], %s177
        // Predicated region
        $region33: #{tpu_custom_call.1} parent=27 // pred_check
          %p179 = pneg %p69
        $region34: #{tpu_custom_call.1} parent=27 // pred_check_branch
          %181 = sbr.rel (%p179) target = $region36
        $region35: #{tpu_custom_call.1} parent=27 // pred_region
          %182 = dma.done %s175, 256
        $region36: #{tpu_custom_call.1} parent=27 // pred_fallthru
          _
        %s183 = sand.u32 %s30, 1
        %s184 = scalar_lea.sflag [#allocation3], %s183
        %s185 = sand.u32 %s30, 1
        %s186 = smul.addr %s185, 16
        %s187 = scalar_lea.vmem [#allocation2], %s186
        %p188 = pneg %p43
        %p189 = pneg %p40
        %s190 = sand.u32 %s56, 1
        %s191 = scalar_lea.sflag [#allocation6], %s190
        %s192 = sand.u32 %s56, 1
        %s193 = smul.addr %s192, 16
        %s194 = scalar_lea.vmem [#allocation5], %s193
        %p195 = pneg %p69
        %p196 = pneg %p66
        %p197 = pneg %p95
        %p198 = pneg %p92
        %s199 = sand.u32 %s82, 1
        %s200 = scalar_lea.sflag [#allocation4], %s199
        %s201 = sand.u32 %s82, 1
        %s202 = scalar_lea.vmem [#allocation7], %s201
        %s203 = smul.u32 2, %s22
        %s204 = smul.u32 2, %s22
        %v205 = vld [vmem:[%s169] sm:$0xff]
        %v206 = vld [vmem:[%s169 + $0x8] sm:$0xff]
        %v207 = vunpack.c.l.bf16 %v205
        %v208 = vunpack.c.h.bf16 %v205
        %v209 = vunpack.c.l.bf16 %v206
        %v210 = vunpack.c.h.bf16 %v206
        %v215 = vcombine.high %v207, %v207
        %v216 = vcombine.high %v208, %v208
        %v217 = vcombine.high %v209, %v209
        %v218 = vcombine.high %v210, %v210
        %vm223 = vcmask 1043456
        %v224 = vsel %vm223, %v207, -inf
        %v225 = vsel %vm223, %v215, -inf
        %v226 = vsel %vm223, %v208, -inf
        %v227 = vmax.f32 %v224, %v226
        %v228 = vsel %vm223, %v216, -inf
        %v229 = vmax.f32 %v225, %v228
        %v230 = vmax.f32 %v227, %v229
        %231 = vmax.xlane.f32.xlu0 %v230
        %v232 = vpop.xlane.xlu0 %231
        %v233 = vsel %vm223, %v209, -inf
        %v234 = vsel %vm223, %v217, -inf
        %v235 = vsel %vm223, %v210, -inf
        %v236 = vmax.f32 %v233, %v235
        %v237 = vsel %vm223, %v218, -inf
        %v238 = vmax.f32 %v234, %v237
        %v239 = vmax.f32 %v236, %v238
        %240 = vmax.xlane.f32.xlu0 %v239
        %v241 = vpop.xlane.xlu0 %240
        %v245 = vunpack.c.l.s4 839922192
        %v246 = vunpack.c.0.s8 %v245
        %v247 = vlaneseq
        %v248 = vshrl.u32 %v247, 7
        %v249 = vsub.s32 %v246, %v248
        %v250 = vrot.slane %v232, %v249
        %v252 = vunpack.c.l.s4 839922192
        %v253 = vunpack.c.0.s8 %v252
        %v254 = vlaneseq
        %v255 = vshrl.u32 %v254, 7
        %v256 = vsub.s32 %v253, %v255
        %v257 = vrot.slane %v241, %v256
        %v260 = vsub.f32 %v207, %v250
        %v261 = vsub.f32 %v208, %v250
        %v262 = vsub.f32 %v209, %v257
        %v263 = vsub.f32 %v210, %v257
        %v264 = vmul.f32 %v260, 1.442695
        %v265 = vpow.pop %v264
        %v266 = vmul.f32 %v261, 1.442695
        %v267 = vpow.pop %v266
        %v268 = vmul.f32 %v262, 1.442695
        %v269 = vpow.pop %v268
        %v270 = vmul.f32 %v263, 1.442695
        %v271 = vpow.pop %v270
        %v276 = vcombine.high %v265, %v265
        %v277 = vcombine.high %v267, %v267
        %v278 = vcombine.high %v269, %v269
        %v279 = vcombine.high %v271, %v271
        %v284 = vsel %vm223, %v265, 0.0
        %v285 = vsel %vm223, %v276, 0.0
        %v286 = vadd.f32 %v284, %v285
        %v287 = vsel %vm223, %v267, 0.0
        %v288 = vadd.f32 %v286, %v287
        %v289 = vsel %vm223, %v277, 0.0
        %v290 = vadd.f32 %v288, %v289
        %291 = vadd.xlane.f32.xlu0 %v290
        %v292 = vpop.xlane.xlu0 %291
        %v293 = vsel %vm223, %v269, 0.0
        %v294 = vsel %vm223, %v278, 0.0
        %v295 = vadd.f32 %v293, %v294
        %v296 = vsel %vm223, %v271, 0.0
        %v297 = vadd.f32 %v295, %v296
        %v298 = vsel %vm223, %v279, 0.0
        %v299 = vadd.f32 %v297, %v298
        %300 = vadd.xlane.f32.xlu0 %v299
        %v301 = vpop.xlane.xlu0 %300
        %v302 = vrcp.pop %v292
        %v303 = vrcp.pop %v301
        %v307 = vunpack.c.l.s4 839922192
        %v308 = vunpack.c.0.s8 %v307
        %v309 = vlaneseq
        %v310 = vshrl.u32 %v309, 7
        %v311 = vsub.s32 %v308, %v310
        %v312 = vrot.slane %v302, %v311
        %v314 = vunpack.c.l.s4 839922192
        %v315 = vunpack.c.0.s8 %v314
        %v316 = vlaneseq
        %v317 = vshrl.u32 %v316, 7
        %v318 = vsub.s32 %v315, %v317
        %v319 = vrot.slane %v303, %v318
        %v322 = vmul.f32 %v265, %v312
        %v323 = vmul.f32 %v267, %v312
        %v324 = vmul.f32 %v269, %v319
        %v325 = vmul.f32 %v271, %v319
        %v326 = vld [vmem:[%s178] sm:$0xff]
        %v327 = vld [vmem:[%s178 + $0x8] sm:$0xff]
        %v328 = vunpack.c.l.bf16 %v326
        %v329 = vunpack.c.h.bf16 %v326
        %v330 = vunpack.c.l.bf16 %v327
        %v331 = vunpack.c.h.bf16 %v327
        %v336 = vcombine.high %v328, %v328
        %v337 = vcombine.high %v329, %v329
        %v338 = vcombine.high %v330, %v330
        %v339 = vcombine.high %v331, %v331
        %v344 = vsel %vm223, %v328, -inf
        %v345 = vsel %vm223, %v336, -inf
        %v346 = vsel %vm223, %v329, -inf
        %v347 = vmax.f32 %v344, %v346
        %v348 = vsel %vm223, %v337, -inf
        %v349 = vmax.f32 %v345, %v348
        %v350 = vmax.f32 %v347, %v349
        %351 = vmax.xlane.f32.xlu0 %v350
        %v352 = vpop.xlane.xlu0 %351
        %v353 = vsel %vm223, %v330, -inf
        %v354 = vsel %vm223, %v338, -inf
        %v355 = vsel %vm223, %v331, -inf
        %v356 = vmax.f32 %v353, %v355
        %v357 = vsel %vm223, %v339, -inf
        %v358 = vmax.f32 %v354, %v357
        %v359 = vmax.f32 %v356, %v358
        %360 = vmax.xlane.f32.xlu0 %v359
        %v361 = vpop.xlane.xlu0 %360
        %v365 = vunpack.c.l.s4 839922192
        %v366 = vunpack.c.0.s8 %v365
        %v367 = vlaneseq
        %v368 = vshrl.u32 %v367, 7
        %v369 = vsub.s32 %v366, %v368
        %v370 = vrot.slane %v352, %v369
        %v372 = vunpack.c.l.s4 839922192
        %v373 = vunpack.c.0.s8 %v372
        %v374 = vlaneseq
        %v375 = vshrl.u32 %v374, 7
        %v376 = vsub.s32 %v373, %v375
        %v377 = vrot.slane %v361, %v376
        %v380 = vsub.f32 %v328, %v370
        %v381 = vsub.f32 %v329, %v370
        %v382 = vsub.f32 %v330, %v377
        %v383 = vsub.f32 %v331, %v377
        %v384 = vmul.f32 %v380, 1.442695
        %v385 = vpow.pop %v384
        %v386 = vmul.f32 %v381, 1.442695
        %v387 = vpow.pop %v386
        %v388 = vmul.f32 %v382, 1.442695
        %v389 = vpow.pop %v388
        %v390 = vmul.f32 %v383, 1.442695
        %v391 = vpow.pop %v390
        %v396 = vcombine.high %v385, %v385
        %v397 = vcombine.high %v387, %v387
        %v398 = vcombine.high %v389, %v389
        %v399 = vcombine.high %v391, %v391
        %v404 = vsel %vm223, %v385, 0.0
        %v405 = vsel %vm223, %v396, 0.0
        %v406 = vadd.f32 %v404, %v405
        %v407 = vsel %vm223, %v387, 0.0
        %v408 = vadd.f32 %v406, %v407
        %v409 = vsel %vm223, %v397, 0.0
        %v410 = vadd.f32 %v408, %v409
        %411 = vadd.xlane.f32.xlu0 %v410
        %v412 = vpop.xlane.xlu0 %411
        %v413 = vsel %vm223, %v389, 0.0
        %v414 = vsel %vm223, %v398, 0.0
        %v415 = vadd.f32 %v413, %v414
        %v416 = vsel %vm223, %v391, 0.0
        %v417 = vadd.f32 %v415, %v416
        %v418 = vsel %vm223, %v399, 0.0
        %v419 = vadd.f32 %v417, %v418
        %420 = vadd.xlane.f32.xlu0 %v419
        %v421 = vpop.xlane.xlu0 %420
        %v422 = vrcp.pop %v412
        %v423 = vrcp.pop %v421
        %v427 = vunpack.c.l.s4 839922192
        %v428 = vunpack.c.0.s8 %v427
        %v429 = vlaneseq
        %v430 = vshrl.u32 %v429, 7
        %v431 = vsub.s32 %v428, %v430
        %v432 = vrot.slane %v422, %v431
        %v434 = vunpack.c.l.s4 839922192
        %v435 = vunpack.c.0.s8 %v434
        %v436 = vlaneseq
        %v437 = vshrl.u32 %v436, 7
        %v438 = vsub.s32 %v435, %v437
        %v439 = vrot.slane %v423, %v438
        %v442 = vmul.f32 %v385, %v432
        %v443 = vmul.f32 %v387, %v432
        %v444 = vmul.f32 %v389, %v439
        %v445 = vmul.f32 %v391, %v439
        %v446 = vmul.f32 %v322, %v442
        %v447 = vmul.f32 %v323, %v443
        %v448 = vmul.f32 %v324, %v444
        %v449 = vmul.f32 %v325, %v445
        %v450 = vmul.f32 %v322, %v322
        %v451 = vmul.f32 %v323, %v323
        %v452 = vmul.f32 %v324, %v324
        %v453 = vmul.f32 %v325, %v325
        %v454 = vmul.f32 %v442, %v442
        %v455 = vmul.f32 %v443, %v443
        %v456 = vmul.f32 %v444, %v444
        %v457 = vmul.f32 %v445, %v445
        %v462 = vcombine.high %v446, %v446
        %v463 = vcombine.high %v447, %v447
        %v464 = vcombine.high %v448, %v448
        %v465 = vcombine.high %v449, %v449
        %v470 = vsel %vm223, %v446, 0.0
        %v471 = vsel %vm223, %v462, 0.0
        %v472 = vadd.f32 %v470, %v471
        %v473 = vsel %vm223, %v447, 0.0
        %v474 = vadd.f32 %v472, %v473
        %v475 = vsel %vm223, %v463, 0.0
        %v476 = vadd.f32 %v474, %v475
        %477 = vadd.xlane.f32.xlu0 %v476
        %v478 = vpop.xlane.xlu0 %477
        %v479 = vsel %vm223, %v448, 0.0
        %v480 = vsel %vm223, %v464, 0.0
        %v481 = vadd.f32 %v479, %v480
        %v482 = vsel %vm223, %v449, 0.0
        %v483 = vadd.f32 %v481, %v482
        %v484 = vsel %vm223, %v465, 0.0
        %v485 = vadd.f32 %v483, %v484
        %486 = vadd.xlane.f32.xlu0 %v485
        %v487 = vpop.xlane.xlu0 %486
        %v488 = vsub.f32 %v478, 0.001953125
        %v489 = vsub.f32 %v487, 0.001953125
        %v494 = vcombine.high %v450, %v450
        %v495 = vcombine.high %v451, %v451
        %v496 = vcombine.high %v452, %v452
        %v497 = vcombine.high %v453, %v453
        %v502 = vsel %vm223, %v450, 0.0
        %v503 = vsel %vm223, %v494, 0.0
        %v504 = vadd.f32 %v502, %v503
        %v505 = vsel %vm223, %v451, 0.0
        %v506 = vadd.f32 %v504, %v505
        %v507 = vsel %vm223, %v495, 0.0
        %v508 = vadd.f32 %v506, %v507
        %509 = vadd.xlane.f32.xlu0 %v508
        %v510 = vpop.xlane.xlu0 %509
        %v511 = vsel %vm223, %v452, 0.0
        %v512 = vsel %vm223, %v496, 0.0
        %v513 = vadd.f32 %v511, %v512
        %v514 = vsel %vm223, %v453, 0.0
        %v515 = vadd.f32 %v513, %v514
        %v516 = vsel %vm223, %v497, 0.0
        %v517 = vadd.f32 %v515, %v516
        %518 = vadd.xlane.f32.xlu0 %v517
        %v519 = vpop.xlane.xlu0 %518
        %v520 = vsub.f32 %v510, 0.001953125
        %v521 = vsub.f32 %v519, 0.001953125
        %v522 = vmax.f32 %v520, 0.0
        %v523 = vmax.f32 %v521, 0.0
        %v528 = vcombine.high %v454, %v454
        %v529 = vcombine.high %v455, %v455
        %v530 = vcombine.high %v456, %v456
        %v531 = vcombine.high %v457, %v457
        %v536 = vsel %vm223, %v454, 0.0
        %v537 = vsel %vm223, %v528, 0.0
        %v538 = vadd.f32 %v536, %v537
        %v539 = vsel %vm223, %v455, 0.0
        %v540 = vadd.f32 %v538, %v539
        %v541 = vsel %vm223, %v529, 0.0
        %v542 = vadd.f32 %v540, %v541
        %543 = vadd.xlane.f32.xlu0 %v542
        %v544 = vpop.xlane.xlu0 %543
        %v545 = vsel %vm223, %v456, 0.0
        %v546 = vsel %vm223, %v530, 0.0
        %v547 = vadd.f32 %v545, %v546
        %v548 = vsel %vm223, %v457, 0.0
        %v549 = vadd.f32 %v547, %v548
        %v550 = vsel %vm223, %v531, 0.0
        %v551 = vadd.f32 %v549, %v550
        %552 = vadd.xlane.f32.xlu0 %v551
        %v553 = vpop.xlane.xlu0 %552
        %v554 = vsub.f32 %v544, 0.001953125
        %v555 = vsub.f32 %v553, 0.001953125
        %v556 = vmax.f32 %v554, 0.0
        %v557 = vmax.f32 %v555, 0.0
        %v558 = vmul.f32 %v522, %v556
        %v559 = vmul.f32 %v523, %v557
        %v560 = vadd.f32 %v558, 1e-08
        %v561 = vadd.f32 %v559, 1e-08
        %v562 = vrsqrt.pop %v560
        %v563 = vrsqrt.pop %v561
        %v564 = vmul.f32 %v488, %v562
        %v565 = vmul.f32 %v489, %v563
        %v568 = vlaneseq
        %v569 = vand.u32 %v568, 127
        %v570 = vlaneseq
        %v571 = vshrl.u32 %v570, 7
        %v572 = vsub.s32 %v569, %v571
        %v573 = vrot.slane %v564, %v572
        %v574 = vlaneseq
        %v575 = vshrl.u32 %v574, 7
        %v576 = vsub.s32 %v569, %v575
        %v577 = vrot.slane %v565, %v576
        %vm578 = vcmask 1041409
        %v579 = vsel %vm578, %v577, %v573
        %vm581 = vcmask 25600
        %v582 = vsel %vm581, %v579, 0.0
        %583 = vadd.xlane.f32.xlu0 %v582
        %v584 = vpop.xlane.xlu0 %583
        %v585 = vrcp.pop 4.0
        %v586 = vmul.f32 %v584, %v585
        %v587 = vsub.f32 1.0, %v586
        %v592 = vcombine.high %v322, %v322
        %v593 = vcombine.high %v323, %v323
        %v594 = vcombine.high %v324, %v324
        %v595 = vcombine.high %v325, %v325
        %v600 = vsel %vm223, %v322, 0.0
        %v601 = vrot.slane %v600, 4
        %v602 = vadd.f32 %v600, %v601
        %v603 = vrot.slane %v602, 2
        %v604 = vadd.f32 %v602, %v603
        %v605 = vrot.slane %v604, 1
        %v606 = vadd.f32 %v604, %v605
        %v607 = vsel %vm223, %v592, 0.0
        %v608 = vrot.slane %v607, 4
        %v609 = vadd.f32 %v607, %v608
        %v610 = vrot.slane %v609, 2
        %v611 = vadd.f32 %v609, %v610
        %v612 = vrot.slane %v611, 1
        %v613 = vadd.f32 %v611, %v612
        %v614 = vsel %vm223, %v323, 0.0
        %v615 = vrot.slane %v614, 4
        %v616 = vadd.f32 %v614, %v615
        %v617 = vrot.slane %v616, 2
        %v618 = vadd.f32 %v616, %v617
        %v619 = vrot.slane %v618, 1
        %v620 = vadd.f32 %v618, %v619
        %v621 = vsel %vm223, %v593, 0.0
        %v622 = vrot.slane %v621, 4
        %v623 = vadd.f32 %v621, %v622
        %v624 = vrot.slane %v623, 2
        %v625 = vadd.f32 %v623, %v624
        %v626 = vrot.slane %v625, 1
        %v627 = vadd.f32 %v625, %v626
        %v628 = vsel %vm223, %v324, 0.0
        %v629 = vrot.slane %v628, 4
        %v630 = vadd.f32 %v628, %v629
        %v631 = vrot.slane %v630, 2
        %v632 = vadd.f32 %v630, %v631
        %v633 = vrot.slane %v632, 1
        %v634 = vadd.f32 %v632, %v633
        %v635 = vsel %vm223, %v594, 0.0
        %v636 = vrot.slane %v635, 4
        %v637 = vadd.f32 %v635, %v636
        %v638 = vrot.slane %v637, 2
        %v639 = vadd.f32 %v637, %v638
        %v640 = vrot.slane %v639, 1
        %v641 = vadd.f32 %v639, %v640
        %v642 = vsel %vm223, %v325, 0.0
        %v643 = vrot.slane %v642, 4
        %v644 = vadd.f32 %v642, %v643
        %v645 = vrot.slane %v644, 2
        %v646 = vadd.f32 %v644, %v645
        %v647 = vrot.slane %v646, 1
        %v648 = vadd.f32 %v646, %v647
        %v649 = vsel %vm223, %v595, 0.0
        %v650 = vrot.slane %v649, 4
        %v651 = vadd.f32 %v649, %v650
        %v652 = vrot.slane %v651, 2
        %v653 = vadd.f32 %v651, %v652
        %v654 = vrot.slane %v653, 1
        %v655 = vadd.f32 %v653, %v654
        %v660 = vcombine.high %v442, %v442
        %v661 = vcombine.high %v443, %v443
        %v662 = vcombine.high %v444, %v444
        %v663 = vcombine.high %v445, %v445
        %v668 = vsel %vm223, %v442, 0.0
        %v669 = vrot.slane %v668, 4
        %v670 = vadd.f32 %v668, %v669
        %v671 = vrot.slane %v670, 2
        %v672 = vadd.f32 %v670, %v671
        %v673 = vrot.slane %v672, 1
        %v674 = vadd.f32 %v672, %v673
        %v675 = vsel %vm223, %v660, 0.0
        %v676 = vrot.slane %v675, 4
        %v677 = vadd.f32 %v675, %v676
        %v678 = vrot.slane %v677, 2
        %v679 = vadd.f32 %v677, %v678
        %v680 = vrot.slane %v679, 1
        %v681 = vadd.f32 %v679, %v680
        %v682 = vsel %vm223, %v443, 0.0
        %v683 = vrot.slane %v682, 4
        %v684 = vadd.f32 %v682, %v683
        %v685 = vrot.slane %v684, 2
        %v686 = vadd.f32 %v684, %v685
        %v687 = vrot.slane %v686, 1
        %v688 = vadd.f32 %v686, %v687
        %v689 = vsel %vm223, %v661, 0.0
        %v690 = vrot.slane %v689, 4
        %v691 = vadd.f32 %v689, %v690
        %v692 = vrot.slane %v691, 2
        %v693 = vadd.f32 %v691, %v692
        %v694 = vrot.slane %v693, 1
        %v695 = vadd.f32 %v693, %v694
        %v696 = vsel %vm223, %v444, 0.0
        %v697 = vrot.slane %v696, 4
        %v698 = vadd.f32 %v696, %v697
        %v699 = vrot.slane %v698, 2
        %v700 = vadd.f32 %v698, %v699
        %v701 = vrot.slane %v700, 1
        %v702 = vadd.f32 %v700, %v701
        %v703 = vsel %vm223, %v662, 0.0
        %v704 = vrot.slane %v703, 4
        %v705 = vadd.f32 %v703, %v704
        %v706 = vrot.slane %v705, 2
        %v707 = vadd.f32 %v705, %v706
        %v708 = vrot.slane %v707, 1
        %v709 = vadd.f32 %v707, %v708
        %v710 = vsel %vm223, %v445, 0.0
        %v711 = vrot.slane %v710, 4
        %v712 = vadd.f32 %v710, %v711
        %v713 = vrot.slane %v712, 2
        %v714 = vadd.f32 %v712, %v713
        %v715 = vrot.slane %v714, 1
        %v716 = vadd.f32 %v714, %v715
        %v717 = vsel %vm223, %v663, 0.0
        %v718 = vrot.slane %v717, 4
        %v719 = vadd.f32 %v717, %v718
        %v720 = vrot.slane %v719, 2
        %v721 = vadd.f32 %v719, %v720
        %v722 = vrot.slane %v721, 1
        %v723 = vadd.f32 %v721, %v722
        %v724 = vrot.slane %v470, 4
        %v725 = vadd.f32 %v470, %v724
        %v726 = vrot.slane %v725, 2
        %v727 = vadd.f32 %v725, %v726
        %v728 = vrot.slane %v727, 1
        %v729 = vadd.f32 %v727, %v728
        %v730 = vrot.slane %v471, 4
        %v731 = vadd.f32 %v471, %v730
        %v732 = vrot.slane %v731, 2
        %v733 = vadd.f32 %v731, %v732
        %v734 = vrot.slane %v733, 1
        %v735 = vadd.f32 %v733, %v734
        %v736 = vrot.slane %v473, 4
        %v737 = vadd.f32 %v473, %v736
        %v738 = vrot.slane %v737, 2
        %v739 = vadd.f32 %v737, %v738
        %v740 = vrot.slane %v739, 1
        %v741 = vadd.f32 %v739, %v740
        %v742 = vrot.slane %v475, 4
        %v743 = vadd.f32 %v475, %v742
        %v744 = vrot.slane %v743, 2
        %v745 = vadd.f32 %v743, %v744
        %v746 = vrot.slane %v745, 1
        %v747 = vadd.f32 %v745, %v746
        %v748 = vrot.slane %v479, 4
        %v749 = vadd.f32 %v479, %v748
        %v750 = vrot.slane %v749, 2
        %v751 = vadd.f32 %v749, %v750
        %v752 = vrot.slane %v751, 1
        %v753 = vadd.f32 %v751, %v752
        %v754 = vrot.slane %v480, 4
        %v755 = vadd.f32 %v480, %v754
        %v756 = vrot.slane %v755, 2
        %v757 = vadd.f32 %v755, %v756
        %v758 = vrot.slane %v757, 1
        %v759 = vadd.f32 %v757, %v758
        %v760 = vrot.slane %v482, 4
        %v761 = vadd.f32 %v482, %v760
        %v762 = vrot.slane %v761, 2
        %v763 = vadd.f32 %v761, %v762
        %v764 = vrot.slane %v763, 1
        %v765 = vadd.f32 %v763, %v764
        %v766 = vrot.slane %v484, 4
        %v767 = vadd.f32 %v484, %v766
        %v768 = vrot.slane %v767, 2
        %v769 = vadd.f32 %v767, %v768
        %v770 = vrot.slane %v769, 1
        %v771 = vadd.f32 %v769, %v770
        %v772 = vmul.f32 %v606, 0.25
        %v773 = vmul.f32 %v613, 0.25
        %v774 = vmul.f32 %v620, 0.25
        %v775 = vmul.f32 %v627, 0.25
        %v776 = vmul.f32 %v634, 0.25
        %v777 = vmul.f32 %v641, 0.25
        %v778 = vmul.f32 %v648, 0.25
        %v779 = vmul.f32 %v655, 0.25
        %v780 = vmul.f32 %v772, %v674
        %v781 = vmul.f32 %v773, %v681
        %v782 = vmul.f32 %v774, %v688
        %v783 = vmul.f32 %v775, %v695
        %v784 = vmul.f32 %v776, %v702
        %v785 = vmul.f32 %v777, %v709
        %v786 = vmul.f32 %v778, %v716
        %v787 = vmul.f32 %v779, %v723
        %v788 = vsub.f32 %v729, %v780
        %v789 = vsub.f32 %v735, %v781
        %v790 = vsub.f32 %v741, %v782
        %v791 = vsub.f32 %v747, %v783
        %v792 = vsub.f32 %v753, %v784
        %v793 = vsub.f32 %v759, %v785
        %v794 = vsub.f32 %v765, %v786
        %v795 = vsub.f32 %v771, %v787
        %v796 = vrot.slane %v502, 4
        %v797 = vadd.f32 %v502, %v796
        %v798 = vrot.slane %v797, 2
        %v799 = vadd.f32 %v797, %v798
        %v800 = vrot.slane %v799, 1
        %v801 = vadd.f32 %v799, %v800
        %v802 = vrot.slane %v503, 4
        %v803 = vadd.f32 %v503, %v802
        %v804 = vrot.slane %v803, 2
        %v805 = vadd.f32 %v803, %v804
        %v806 = vrot.slane %v805, 1
        %v807 = vadd.f32 %v805, %v806
        %v808 = vrot.slane %v505, 4
        %v809 = vadd.f32 %v505, %v808
        %v810 = vrot.slane %v809, 2
        %v811 = vadd.f32 %v809, %v810
        %v812 = vrot.slane %v811, 1
        %v813 = vadd.f32 %v811, %v812
        %v814 = vrot.slane %v507, 4
        %v815 = vadd.f32 %v507, %v814
        %v816 = vrot.slane %v815, 2
        %v817 = vadd.f32 %v815, %v816
        %v818 = vrot.slane %v817, 1
        %v819 = vadd.f32 %v817, %v818
        %v820 = vrot.slane %v511, 4
        %v821 = vadd.f32 %v511, %v820
        %v822 = vrot.slane %v821, 2
        %v823 = vadd.f32 %v821, %v822
        %v824 = vrot.slane %v823, 1
        %v825 = vadd.f32 %v823, %v824
        %v826 = vrot.slane %v512, 4
        %v827 = vadd.f32 %v512, %v826
        %v828 = vrot.slane %v827, 2
        %v829 = vadd.f32 %v827, %v828
        %v830 = vrot.slane %v829, 1
        %v831 = vadd.f32 %v829, %v830
        %v832 = vrot.slane %v514, 4
        %v833 = vadd.f32 %v514, %v832
        %v834 = vrot.slane %v833, 2
        %v835 = vadd.f32 %v833, %v834
        %v836 = vrot.slane %v835, 1
        %v837 = vadd.f32 %v835, %v836
        %v838 = vrot.slane %v516, 4
        %v839 = vadd.f32 %v516, %v838
        %v840 = vrot.slane %v839, 2
        %v841 = vadd.f32 %v839, %v840
        %v842 = vrot.slane %v841, 1
        %v843 = vadd.f32 %v841, %v842
        %v844 = vmul.f32 %v772, %v606
        %v845 = vmul.f32 %v773, %v613
        %v846 = vmul.f32 %v774, %v620
        %v847 = vmul.f32 %v775, %v627
        %v848 = vmul.f32 %v776, %v634
        %v849 = vmul.f32 %v777, %v641
        %v850 = vmul.f32 %v778, %v648
        %v851 = vmul.f32 %v779, %v655
        %v852 = vsub.f32 %v801, %v844
        %v853 = vsub.f32 %v807, %v845
        %v854 = vsub.f32 %v813, %v846
        %v855 = vsub.f32 %v819, %v847
        %v856 = vsub.f32 %v825, %v848
        %v857 = vsub.f32 %v831, %v849
        %v858 = vsub.f32 %v837, %v850
        %v859 = vsub.f32 %v843, %v851
        %v860 = vmax.f32 %v852, 0.0
        %v861 = vmax.f32 %v853, 0.0
        %v862 = vmax.f32 %v854, 0.0
        %v863 = vmax.f32 %v855, 0.0
        %v864 = vmax.f32 %v856, 0.0
        %v865 = vmax.f32 %v857, 0.0
        %v866 = vmax.f32 %v858, 0.0
        %v867 = vmax.f32 %v859, 0.0
        %v868 = vrot.slane %v536, 4
        %v869 = vadd.f32 %v536, %v868
        %v870 = vrot.slane %v869, 2
        %v871 = vadd.f32 %v869, %v870
        %v872 = vrot.slane %v871, 1
        %v873 = vadd.f32 %v871, %v872
        %v874 = vrot.slane %v537, 4
        %v875 = vadd.f32 %v537, %v874
        %v876 = vrot.slane %v875, 2
        %v877 = vadd.f32 %v875, %v876
        %v878 = vrot.slane %v877, 1
        %v879 = vadd.f32 %v877, %v878
        %v880 = vrot.slane %v539, 4
        %v881 = vadd.f32 %v539, %v880
        %v882 = vrot.slane %v881, 2
        %v883 = vadd.f32 %v881, %v882
        %v884 = vrot.slane %v883, 1
        %v885 = vadd.f32 %v883, %v884
        %v886 = vrot.slane %v541, 4
        %v887 = vadd.f32 %v541, %v886
        %v888 = vrot.slane %v887, 2
        %v889 = vadd.f32 %v887, %v888
        %v890 = vrot.slane %v889, 1
        %v891 = vadd.f32 %v889, %v890
        %v892 = vrot.slane %v545, 4
        %v893 = vadd.f32 %v545, %v892
        %v894 = vrot.slane %v893, 2
        %v895 = vadd.f32 %v893, %v894
        %v896 = vrot.slane %v895, 1
        %v897 = vadd.f32 %v895, %v896
        %v898 = vrot.slane %v546, 4
        %v899 = vadd.f32 %v546, %v898
        %v900 = vrot.slane %v899, 2
        %v901 = vadd.f32 %v899, %v900
        %v902 = vrot.slane %v901, 1
        %v903 = vadd.f32 %v901, %v902
        %v904 = vrot.slane %v548, 4
        %v905 = vadd.f32 %v548, %v904
        %v906 = vrot.slane %v905, 2
        %v907 = vadd.f32 %v905, %v906
        %v908 = vrot.slane %v907, 1
        %v909 = vadd.f32 %v907, %v908
        %v910 = vrot.slane %v550, 4
        %v911 = vadd.f32 %v550, %v910
        %v912 = vrot.slane %v911, 2
        %v913 = vadd.f32 %v911, %v912
        %v914 = vrot.slane %v913, 1
        %v915 = vadd.f32 %v913, %v914
        %v916 = vmul.f32 %v674, 0.25
        %v917 = vmul.f32 %v681, 0.25
        %v918 = vmul.f32 %v688, 0.25
        %v919 = vmul.f32 %v695, 0.25
        %v920 = vmul.f32 %v702, 0.25
        %v921 = vmul.f32 %v709, 0.25
        %v922 = vmul.f32 %v716, 0.25
        %v923 = vmul.f32 %v723, 0.25
        %v924 = vmul.f32 %v916, %v674
        %v925 = vmul.f32 %v917, %v681
        %v926 = vmul.f32 %v918, %v688
        %v927 = vmul.f32 %v919, %v695
        %v928 = vmul.f32 %v920, %v702
        %v929 = vmul.f32 %v921, %v709
        %v930 = vmul.f32 %v922, %v716
        %v931 = vmul.f32 %v923, %v723
        %v932 = vsub.f32 %v873, %v924
        %v933 = vsub.f32 %v879, %v925
        %v934 = vsub.f32 %v885, %v926
        %v935 = vsub.f32 %v891, %v927
        %v936 = vsub.f32 %v897, %v928
        %v937 = vsub.f32 %v903, %v929
        %v938 = vsub.f32 %v909, %v930
        %v939 = vsub.f32 %v915, %v931
        %v940 = vmax.f32 %v932, 0.0
        %v941 = vmax.f32 %v933, 0.0
        %v942 = vmax.f32 %v934, 0.0
        %v943 = vmax.f32 %v935, 0.0
        %v944 = vmax.f32 %v936, 0.0
        %v945 = vmax.f32 %v937, 0.0
        %v946 = vmax.f32 %v938, 0.0
        %v947 = vmax.f32 %v939, 0.0
        %v948 = vmul.f32 %v860, %v940
        %v949 = vmul.f32 %v861, %v941
        %v950 = vmul.f32 %v862, %v942
        %v951 = vmul.f32 %v863, %v943
        %v952 = vmul.f32 %v864, %v944
        %v953 = vmul.f32 %v865, %v945
        %v954 = vmul.f32 %v866, %v946
        %v955 = vmul.f32 %v867, %v947
        %v956 = vadd.f32 %v948, 1e-08
        %v957 = vadd.f32 %v949, 1e-08
        %v958 = vadd.f32 %v950, 1e-08
        %v959 = vadd.f32 %v951, 1e-08
        %v960 = vadd.f32 %v952, 1e-08
        %v961 = vadd.f32 %v953, 1e-08
        %v962 = vadd.f32 %v954, 1e-08
        %v963 = vadd.f32 %v955, 1e-08
        %v964 = vrsqrt.pop %v956
        %v965 = vrsqrt.pop %v957
        %v966 = vrsqrt.pop %v958
        %v967 = vrsqrt.pop %v959
        %v968 = vrsqrt.pop %v960
        %v969 = vrsqrt.pop %v961
        %v970 = vrsqrt.pop %v962
        %v971 = vrsqrt.pop %v963
        %v972 = vmul.f32 %v788, %v964
        %v973 = vmul.f32 %v789, %v965
        %v974 = vmul.f32 %v790, %v966
        %v975 = vmul.f32 %v791, %v967
        %v976 = vmul.f32 %v792, %v968
        %v977 = vmul.f32 %v793, %v969
        %v978 = vmul.f32 %v794, %v970
        %v979 = vmul.f32 %v795, %v971
        %v988 = vsel %vm578, %v976, %v972
        %v989 = vsel %vm578, %v977, %v973
        %v990 = vsel %vm578, %v978, %v974
        %v991 = vsel %vm578, %v979, %v975
        %vm996 = vcmask 1041408
        %v997 = vsel %vm996, %v988, 0.0
        %v998 = vsel %vm996, %v989, 0.0
        %v999 = vadd.f32 %v997, %v998
        %v1000 = vsel %vm996, %v990, 0.0
        %v1001 = vadd.f32 %v999, %v1000
        %v1002 = vsel %vm996, %v991, 0.0
        %v1003 = vadd.f32 %v1001, %v1002
        %1004 = vadd.xlane.f32.xlu0 %v1003
        %v1005 = vpop.xlane.xlu0 %1004
        %v1006 = vrcp.pop 512.0
        %v1007 = vmul.f32 %v1005, %v1006
        %v1008 = vsub.f32 1.0, %v1007
        %v1009 = vadd.f32 %v587, %v1008
        %v1011 = vlaneseq
        %v1012 = vshrl.u32 %v1011, 7
        %v1013 = vsub.s32 %v569, %v1012
        %v1014 = vrot.slane %v1009, %v1013
        %vm1016 = vcmask 8192
        %1017 = vst.msk [vmem:[%s202] sm:$0x1] %vm1016, %v1014
        %s1018 = sand.u32 %s82, 1
        %s1019 = scalar_lea.sflag [#allocation4], %s1018
        %s1020 = sand.u32 %s82, 1
        %s1021 = scalar_lea.vmem [#allocation7], %s1020
        // Predicated region
        $region37: #{tpu_custom_call.1} parent=27 // pred_check
          %p1022 = pneg %p92
        $region38: #{tpu_custom_call.1} parent=27 // pred_check_branch
          %1024 = sbr.rel (%p1022) target = $region40
        $region39: #{tpu_custom_call.1} parent=27 // pred_region
          %s1026 = ssub.s32 16, 16
          %1027 = vsyncadd %s1019, %s1026
          %s1028 = smul.addr %s22, 16
          %s1029 = scalar_lea.hbm %s2, %s1028
          %s1031 = sshll.u32 %s1021, 4
          %s1032 = int_to_ptr.vmem [resolvable:$true] %s1031
          %1034 = dma.vmem_to_hbm [thread:$0]  %s1032, 16, %s1029, %s1019
        $region40: #{tpu_custom_call.1} parent=27 // pred_fallthru
          _
      $region28: #{tpu_custom_call.1} parent=5 // pred_fallthru
        _
      %p1035 = scmp.le.s32.totalorder 2, %s17
      // Predicated region
      $region41: #{tpu_custom_call.1} parent=5 // pred_check
        %p1036 = pneg %p1035
      $region42: #{tpu_custom_call.1} parent=5 // pred_check_branch
        %1038 = sbr.rel (%p1036) target = $region44
      $region43: #{tpu_custom_call.1} parent=5 // pred_region
        %s1039 = ssub.s32 %s17, 2
        // Predicated region
        $region45: #{tpu_custom_call.1} parent=43 // pred_check
          %p1040 = pneg %p98
        $region46: #{tpu_custom_call.1} parent=43 // pred_check_branch
          %1042 = sbr.rel (%p1040) target = $region48
        $region47: #{tpu_custom_call.1} parent=43 // pred_region
          %s1043 = sand.u32 %s83, 1
          %s1044 = scalar_lea.sflag [#allocation4], %s1043
          %s1045 = sand.u32 %s83, 1
          %s1046 = scalar_lea.vmem [#allocation7], %s1045
          %1047 = dma.done %s1044, 16
        $region48: #{tpu_custom_call.1} parent=43 // pred_fallthru
          _
      $region44: #{tpu_custom_call.1} parent=5 // pred_fallthru
        _
    $region6: #{tpu_custom_call.1} parent=1 // loop_footer
      %s21 = sadd.s32 1, %s17
    $region7: #{tpu_custom_call.1} parent=1 // loop_footer_branch
      %16 = sbr.rel target = $region3
    $region8: #{tpu_custom_call.1} parent=1 // loop_exit
      _
    %1048 = vsyncpa [#allocation3], 1
    %s1049 = scalar_lea.sflag [#allocation3], 1
    %1050 = vsyncpa %s1049, 1
    %1051 = vsyncpa [#allocation6], 1
    %s1052 = scalar_lea.sflag [#allocation6], 1
    %1053 = vsyncpa %s1052, 1
    %1054 = vsyncpa [#allocation4], 1
    %s1055 = scalar_lea.sflag [#allocation4], 1
    %1056 = vsyncpa %s1055, 1

</llo_original>
